<compile_context>
chip_gen: v6e
topology: v6e:2x2x1
jax: 0.10.0
libtpu: 0.0.40
codegen_flags: <defaults>
</compile_context>

<pallas_src>
import functools

import jax
import jax.numpy as jnp
from jax import lax
from jax.experimental import pallas as pl
from jax.experimental.pallas import tpu as pltpu


def _round_up(x, m):
    return ((x + m - 1) // m) * m


def _channel_gate_kernel(x_ref, w1_ref, w2_ref, o_ref):
    # x_ref:  [TM, d_model]
    # w1_ref: [d_hidden, d_model]   (PyTorch layout; contract on its dim 1)
    # w2_ref: [d_model, d_hidden]
    # o_ref:  [TM, d_model]
    nt = (((1,), (1,)), ((), ()))  # a @ b.T without materializing a transpose
    h = lax.dot_general(
        x_ref[...], w1_ref[...], dimension_numbers=nt,
        preferred_element_type=jnp.float32)
    h = jnp.maximum(h, 0.0)                                  # ReLU (VPU)
    y = lax.dot_general(
        h.astype(w2_ref.dtype), w2_ref[...], dimension_numbers=nt,
        preferred_element_type=jnp.float32)
    o_ref[...] = jax.nn.sigmoid(y).astype(o_ref.dtype)       # sigmoid (EUP)


def _pick_row_tile(m, d_model, d_hidden, itemsize, max_tile, vmem_budget_bytes):
    """Largest row tile (multiple of 8, <= max_tile) fitting the VMEM budget."""
    weight_bytes = (d_hidden * d_model + d_model * d_hidden) * itemsize
    # x tile + out tile, each double-buffered by the Pallas pipeline, plus the
    # f32 intermediate [tm, d_hidden] and f32 pre-activation [tm, d_model].
    per_row = 2 * 2 * d_model * itemsize + (d_hidden + d_model) * 4
    avail = max(vmem_budget_bytes - weight_bytes, per_row * 8)
    tm = min(max_tile, (avail // per_row) // 8 * 8, _round_up(m, 8))
    return max(tm, 8)


@functools.partial(jax.jit, static_argnames=("block_m",))
def channel_gate_forward(x, w1, w2, *, block_m=1024):
    """
    x:  [..., d_model]
    w1: [d_model // 2, d_model]   (PyTorch nn.Linear layout)
    w2: [d_model, d_model // 2]
    returns sigmoid(relu(x @ w1.T) @ w2.T), same shape as x.
    """
    *lead, d_model = x.shape
    d_hidden, d_model_w = w1.shape
    assert d_model_w == d_model
    assert w2.shape == (d_model, d_hidden)

    M = 1
    for s in lead:
        M *= int(s)
    x2d = x.reshape(M, d_model)

    # Conservative scoped-VMEM budget (works on v5e/v6e default 16-32 MiB and
    # on v7x's smaller physical VMEM); explicitly requested below.
    vmem_budget = 24 << 20
    tm = _pick_row_tile(M, d_model, d_hidden, x.dtype.itemsize, block_m,
                        vmem_budget)
    m_pad = _round_up(M, tm)
    if m_pad != M:
        x2d = jnp.pad(x2d, ((0, m_pad - M), (0, 0)))

    grid_m = m_pad // tm
    flops = 2 * m_pad * d_model * d_hidden * 2           # two matmuls
    bytes_accessed = (2 * m_pad * d_model + 2 * d_model * d_hidden) * x.dtype.itemsize

    out = pl.pallas_call(
        _channel_gate_kernel,
        out_shape=jax.ShapeDtypeStruct((m_pad, d_model), x.dtype),
        grid_spec=pltpu.PrefetchScalarGridSpec(
            num_scalar_prefetch=0,
            grid=(grid_m,),
            in_specs=[
                pl.BlockSpec((tm, d_model), lambda i: (i, 0)),        # streamed rows
                pl.BlockSpec((d_hidden, d_model), lambda i: (0, 0)),  # VMEM-resident
                pl.BlockSpec((d_model, d_hidden), lambda i: (0, 0)),  # VMEM-resident
            ],
            out_specs=pl.BlockSpec((tm, d_model), lambda i: (i, 0)),
        ),
        compiler_params=pltpu.CompilerParams(
            # Rows are independent -> shard the grid across TensorCores (2x on v7x).
            dimension_semantics=("parallel",),
            vmem_limit_bytes=vmem_budget + (4 << 20),
        ),
        cost_estimate=pl.CostEstimate(
            flops=flops,
            transcendentals=m_pad * d_model,              # sigmoid -> exp on EUP
            bytes_accessed=bytes_accessed,
        ),
    )(x2d, w1, w2)

    if m_pad != M:
        out = out[:M]
    return out.reshape(*lead, d_model)


if __name__ == "__main__":
    # Small shapes consistent with the module: x [B, n_vars, seq, d_model].
    B, n_vars, seq, d_model = 2, 4, 8, 32
    d_hidden = d_model // 2

    key = jax.random.PRNGKey(0)
    kx, k1, k2 = jax.random.split(key, 3)

    x = jax.random.normal(kx, (B, n_vars, seq, d_model), dtype=jnp.float32)
    # Deterministic synthetic params matching nn.Linear(d_model, d_model//2, bias=False)
    # and nn.Linear(d_model//2, d_model, bias=False) shapes.
    w1 = jax.random.normal(k1, (d_hidden, d_model), dtype=jnp.float32) * 0.1
    w2 = jax.random.normal(k2, (d_model, d_hidden), dtype=jnp.float32) * 0.1

    out = channel_gate_forward(x, w1, w2)
    out = jax.block_until_ready(out)

    # Pure-JAX reference.
    ref = jax.nn.sigmoid(jnp.maximum(x @ w1.T, 0.0) @ w2.T)
    assert out.shape == x.shape
    assert jnp.allclose(out, ref, atol=1e-5, rtol=1e-5)

    print("KERNEL_OK")
</pallas_src>

<mosaic_0001>
module attributes {stable_mosaic.version = 11 : i64} {
  func.func @_channel_gate_kernel(%arg0: i32, %arg1: memref<64x32xf32, #tpu.memory_space<vmem>>, %arg2: memref<16x32xf32, #tpu.memory_space<vmem>>, %arg3: memref<32x16xf32, #tpu.memory_space<vmem>>, %arg4: memref<64x32xf32, #tpu.memory_space<vmem>>) attributes {dimension_semantics = [#tpu.dimension_semantics<parallel>], iteration_bounds = array<i64: 1>, scalar_prefetch = 0 : i64, scratch_operands = 0 : i64, tpu.core_type = #tpu.core_type<tc>, window_params = [{transform_indices = @transform_0, window_bounds = array<i64: 64, 32>}, {pipeline_mode = #tpu.pipeline_mode<synchronous>, transform_indices = @transform_1, window_bounds = array<i64: 16, 32>}, {pipeline_mode = #tpu.pipeline_mode<synchronous>, transform_indices = @transform_2, window_bounds = array<i64: 32, 16>}, {transform_indices = @transform_3, window_bounds = array<i64: 64, 32>}]} {
    %c0 = arith.constant 0 : index
    %c0_0 = arith.constant 0 : index
    %0 = vector.load %arg1[%c0, %c0_0] : memref<64x32xf32, #tpu.memory_space<vmem>>, vector<64x32xf32>
    %c0_1 = arith.constant 0 : index
    %c0_2 = arith.constant 0 : index
    %1 = vector.load %arg2[%c0_1, %c0_2] : memref<16x32xf32, #tpu.memory_space<vmem>>, vector<16x32xf32>
    %cst = arith.constant dense<0.000000e+00> : vector<64x16xf32>
    %2 = tpu.matmul %0, %1, %cst {dimension_numbers = #tpu.dot_dimension_numbers<[1], [1], [0], [0], [0, 0, 1, 0], [], []>} : vector<64x32xf32>, vector<16x32xf32>, vector<64x16xf32> -> vector<64x16xf32>
    %cst_3 = arith.constant 0.000000e+00 : f32
    %3 = vector.broadcast %cst_3 : f32 to vector<64x16xf32>
    %4 = arith.maximumf %2, %3 : vector<64x16xf32>
    %c0_4 = arith.constant 0 : index
    %c0_5 = arith.constant 0 : index
    %5 = vector.load %arg3[%c0_4, %c0_5] : memref<32x16xf32, #tpu.memory_space<vmem>>, vector<32x16xf32>
    %cst_6 = arith.constant dense<0.000000e+00> : vector<64x32xf32>
    %6 = tpu.matmul %4, %5, %cst_6 {dimension_numbers = #tpu.dot_dimension_numbers<[1], [1], [0], [0], [0, 0, 1, 0], [], []>} : vector<64x16xf32>, vector<32x16xf32>, vector<64x32xf32> -> vector<64x32xf32>
    %7 = arith.negf %6 : vector<64x32xf32>
    %8 = math.exp %7 : vector<64x32xf32>
    %cst_7 = arith.constant 1.000000e+00 : f32
    %9 = vector.broadcast %cst_7 : f32 to vector<64x32xf32>
    %10 = arith.addf %9, %8 : vector<64x32xf32>
    %11 = arith.divf %9, %10 : vector<64x32xf32>
    %c0_8 = arith.constant 0 : index
    %c0_9 = arith.constant 0 : index
    %12 = vector.load %arg4[%c0_8, %c0_9] : memref<64x32xf32, #tpu.memory_space<vmem>>, vector<64x32xf32>
    tpu.vector_store %arg4[%c0_8, %c0_9], %11 {strides = array<i32>} : memref<64x32xf32, #tpu.memory_space<vmem>>, vector<64x32xf32>,
    return
  }
  func.func @transform_0(%arg0: i32) -> (i32, i32) {
    %c0_i32 = arith.constant 0 : i32
    %c0_i32_0 = arith.constant 0 : i32
    return %arg0, %c0_i32 : i32, i32
  }
  func.func @transform_1(%arg0: i32) -> (i32, i32) {
    %c0_i32 = arith.constant 0 : i32
    %c0_i32_0 = arith.constant 0 : i32
    %c0_i32_1 = arith.constant 0 : i32
    return %c0_i32, %c0_i32_0 : i32, i32
  }
  func.func @transform_2(%arg0: i32) -> (i32, i32) {
    %c0_i32 = arith.constant 0 : i32
    %c0_i32_0 = arith.constant 0 : i32
    %c0_i32_1 = arith.constant 0 : i32
    return %c0_i32, %c0_i32_0 : i32, i32
  }
  func.func @transform_3(%arg0: i32) -> (i32, i32) {
    %c0_i32 = arith.constant 0 : i32
    %c0_i32_0 = arith.constant 0 : i32
    return %arg0, %c0_i32 : i32, i32
  }
}

</mosaic_0001>

<llo_original>
// kernel: channel_gate_forward.1
$region0: #{channel_gate_forward.1}
  #allocation0 [shape = 'u32[]', space=smem, size = 0x4, offset = 0x4, fixed_abs, tag = 'smem constant byte address 0x4 - core index']
  #allocation1 [shape = 'u32[144,128]{1,0:T(1,128)}', space=vmem, size = 0x12000, scoped, tag = 'internal scratch']
  %s0 = inlined_call_operand.hbm [shape: f32[64,32], index: 0, kind: input, shape index: {}]
  %s1 = inlined_call_operand.vmem [shape: f32[16,32], index: 1, kind: input, shape index: {}]
  %s2 = inlined_call_operand.vmem [shape: f32[32,16], index: 2, kind: input, shape index: {}]
  %s3 = inlined_call_operand.hbm [shape: f32[64,32], index: 3, kind: output, shape index: {}]
  %s4 = sld [smem:[#allocation0]]
  $region26: #{channel_gate_forward.1} parent=0
    _
  %s6 = ssub.s32 1, %s4
  %s7 = scalar_select 0, %s6, %s4
  $region1: #{channel_gate_forward.1} parent=0
    #allocation2 [shape = 'u8[32768]{0}', space=vmem, size = 0x8000, scoped, tag = 'input window, operand 0, single buffered']
    #allocation3 [shape = 's32[1]{0}', space=sflag, size = 0x4, scoped, tag = 'scoped memory for channel_gate_forward.1']
    #allocation4 [shape = 's32[1]{0}', space=sflag, size = 0x4, scoped, tag = 'scoped memory for channel_gate_forward.1']
    #allocation5 [shape = 'u8[32768]{0}', space=vmem, size = 0x8000, scoped, tag = 'output window, operand 0, single buffered']
    %8 = vsyncpa [#allocation3], 0
    %9 = vsyncpa [#allocation4], 0
    // Predicated region
    $region2: #{channel_gate_forward.1} parent=1 // pred_check
      _
    $region3: #{channel_gate_forward.1} parent=1 // pred_check_branch
      %11 = sbr.rel (0) target = $region5
    $region4: #{channel_gate_forward.1} parent=1 // pred_region
      %s13 = ssub.s32 1024, 1024
      %14 = vsyncadd [#allocation3], %s13
      %s15 = sshll.u32 [#allocation2], 4
      %s16 = int_to_ptr.vmem [resolvable:$true] %s15
      %21 = dma.hbm_to_vmem [thread:$0]  %s0, 1024, %s16, [#allocation3], 128, 128, 8
    $region5: #{channel_gate_forward.1} parent=1 // pred_fallthru
      _
    // Predicated region
    $region6: #{channel_gate_forward.1} parent=1 // pred_check
      _
    $region7: #{channel_gate_forward.1} parent=1 // pred_check_branch
      %23 = sbr.rel (0) target = $region9
    $region8: #{channel_gate_forward.1} parent=1 // pred_region
      _
    $region9: #{channel_gate_forward.1} parent=1 // pred_fallthru
      _
    // Predicated region
    $region10: #{channel_gate_forward.1} parent=1 // pred_check
      _
    $region11: #{channel_gate_forward.1} parent=1 // pred_check_branch
      %25 = sbr.rel (0) target = $region13
    $region12: #{channel_gate_forward.1} parent=1 // pred_region
      _
    $region13: #{channel_gate_forward.1} parent=1 // pred_fallthru
      _
    // Predicated region
    $region14: #{channel_gate_forward.1} parent=1 // pred_check
      _
    $region15: #{channel_gate_forward.1} parent=1 // pred_check_branch
      %27 = sbr.rel (0) target = $region17
    $region16: #{channel_gate_forward.1} parent=1 // pred_region
      %28 = dma.done [#allocation3], 1024
    $region17: #{channel_gate_forward.1} parent=1 // pred_fallthru
      _
    %v29 = vld [vmem:[#allocation2] sm:$0xff]
    %v30 = vld [vmem:[#allocation2 + $0x8] sm:$0xff]
    %v31 = vld [vmem:[#allocation2 + $0x10] sm:$0xff]
    %v32 = vld [vmem:[#allocation2 + $0x18] sm:$0xff]
    %v33 = vld [vmem:[#allocation2 + $0x20] sm:$0xff]
    %v34 = vld [vmem:[#allocation2 + $0x28] sm:$0xff]
    %v35 = vld [vmem:[#allocation2 + $0x30] sm:$0xff]
    %v36 = vld [vmem:[#allocation2 + $0x38] sm:$0xff]
    %v37 = vld [vmem:[%s1] sm:$0xff]
    %v38 = vld [vmem:[%s1 + $0x8] sm:$0xff]
    %vm39 = vcmask 261120
    %v41 = vsel %vm39, %v29, 0
    %v44 = vsel %vm39, %v30, 0
    %v47 = vsel %vm39, %v31, 0
    %v50 = vsel %vm39, %v32, 0
    %v53 = vsel %vm39, %v33, 0
    %v56 = vsel %vm39, %v34, 0
    %v59 = vsel %vm39, %v35, 0
    %v62 = vsel %vm39, %v36, 0
    %v65 = vsel %vm39, %v37, 0
    %v68 = vsel %vm39, %v38, 0
    %70 = vmatprep.subr.mxu0 0.0
    %71 = vmatpush1.xpose.msra.mxu0 0.0
    %72 = vmatprep.subr.mxu0 0.0
    %73 = vmatpush1.xpose.msra.mxu0 0.0
    %74 = vmatprep.subr.mxu0 0.0
    %75 = vmatpush1.xpose.msra.mxu0 0.0
    %76 = vmatprep.subr.mxu0 0.0
    %77 = vmatpush1.xpose.msra.mxu0 0.0
    %78 = vmatprep.subr.mxu0 0.0
    %79 = vmatpush1.xpose.msra.mxu0 0.0
    %80 = vmatprep.subr.mxu0 0.0
    %81 = vmatpush1.xpose.msra.mxu0 0.0
    %82 = vmatprep.subr.mxu0 0.0
    %83 = vmatpush1.xpose.msra.mxu0 0.0
    %84 = vmatprep.subr.mxu0 0.0
    %85 = vmatpush1.xpose.msra.mxu0 0.0
    %86 = vmatprep.subr.mxu0 0.0
    %87 = vmatpush1.xpose.msra.mxu0 0.0
    %88 = vmatprep.subr.mxu0 0.0
    %89 = vmatpush1.xpose.msra.mxu0 0.0
    %90 = vmatprep.subr.mxu0 0.0
    %91 = vmatpush1.xpose.msra.mxu0 0.0
    %92 = vmatprep.subr.mxu0 0.0
    %93 = vmatpush1.xpose.msra.mxu0 0.0
    %94 = vmatprep.subr.mxu0 0.0
    %95 = vmatpush1.xpose.msra.mxu0 0.0
    %96 = vmatprep.subr.mxu0 0.0
    %97 = vmatpush1.xpose.msra.mxu0 0.0
    %98 = vmatprep.subr.mxu0 0.0
    %99 = vmatpush1.xpose.msra.mxu0 %v68
    %100 = vmatprep.subr.mxu0 0.0
    %101 = vmatpush1.xpose.msra.mxu0 %v65
    %102 = vmatprep.subr.mxu0 0.0
    %103 = vmatpush2.xpose.msra.mxu0 0.0
    %104 = vmatprep.subr.mxu0 0.0
    %105 = vmatpush2.xpose.msra.mxu0 0.0
    %106 = vmatprep.subr.mxu0 0.0
    %107 = vmatpush2.xpose.msra.mxu0 0.0
    %108 = vmatprep.subr.mxu0 0.0
    %109 = vmatpush2.xpose.msra.mxu0 0.0
    %110 = vmatprep.subr.mxu0 0.0
    %111 = vmatpush2.xpose.msra.mxu0 0.0
    %112 = vmatprep.subr.mxu0 0.0
    %113 = vmatpush2.xpose.msra.mxu0 0.0
    %114 = vmatprep.subr.mxu0 0.0
    %115 = vmatpush2.xpose.msra.mxu0 0.0
    %116 = vmatprep.subr.mxu0 0.0
    %117 = vmatpush2.xpose.msra.mxu0 0.0
    %118 = vmatprep.subr.mxu0 0.0
    %119 = vmatpush2.xpose.msra.mxu0 0.0
    %120 = vmatprep.subr.mxu0 0.0
    %121 = vmatpush2.xpose.msra.mxu0 0.0
    %122 = vmatprep.subr.mxu0 0.0
    %123 = vmatpush2.xpose.msra.mxu0 0.0
    %124 = vmatprep.subr.mxu0 0.0
    %125 = vmatpush2.xpose.msra.mxu0 0.0
    %126 = vmatprep.subr.mxu0 0.0
    %127 = vmatpush2.xpose.msra.mxu0 0.0
    %128 = vmatprep.subr.mxu0 0.0
    %129 = vmatpush2.xpose.msra.mxu0 0.0
    %130 = vmatprep.subr.mxu0 0.0
    %131 = vmatpush2.xpose.msra.mxu0 0.0
    %132 = vmatprep.subr.mxu0 0.0
    %133 = vmatpush2.xpose.msra.mxu0 0.0
    %134 = vmatprep.mubr.f32.mxu0 0.0
    %135 = vmatmul.mubr.f32.gmra.mxu0 %v41
    %v136 = vpop.f32.mrf.mxu0
    %v137 = vadd.f32 0.0, %v136
    %v138 = vpop.f32.mrf.mxu0
    %139 = vmatprep.mubr.f32.mxu0 0.0
    %140 = vmatmul.mubr.f32.gmra.mxu0 %v44
    %v141 = vpop.f32.mrf.mxu0
    %v142 = vadd.f32 0.0, %v141
    %v143 = vpop.f32.mrf.mxu0
    %144 = vmatprep.mubr.f32.mxu0 0.0
    %145 = vmatmul.mubr.f32.gmra.mxu0 %v47
    %v146 = vpop.f32.mrf.mxu0
    %v147 = vadd.f32 0.0, %v146
    %v148 = vpop.f32.mrf.mxu0
    %149 = vmatprep.mubr.f32.mxu0 0.0
    %150 = vmatmul.mubr.f32.gmra.mxu0 %v50
    %v151 = vpop.f32.mrf.mxu0
    %v152 = vadd.f32 0.0, %v151
    %v153 = vpop.f32.mrf.mxu0
    %154 = vmatprep.mubr.f32.mxu0 0.0
    %155 = vmatmul.mubr.f32.gmra.mxu0 %v53
    %v156 = vpop.f32.mrf.mxu0
    %v157 = vadd.f32 0.0, %v156
    %v158 = vpop.f32.mrf.mxu0
    %159 = vmatprep.mubr.f32.mxu0 0.0
    %160 = vmatmul.mubr.f32.gmra.mxu0 %v56
    %v161 = vpop.f32.mrf.mxu0
    %v162 = vadd.f32 0.0, %v161
    %v163 = vpop.f32.mrf.mxu0
    %164 = vmatprep.mubr.f32.mxu0 0.0
    %165 = vmatmul.mubr.f32.gmra.mxu0 %v59
    %v166 = vpop.f32.mrf.mxu0
    %v167 = vadd.f32 0.0, %v166
    %v168 = vpop.f32.mrf.mxu0
    %169 = vmatprep.mubr.f32.mxu0 0.0
    %170 = vmatmul.mubr.f32.gmra.mxu0 %v62
    %v171 = vpop.f32.mrf.mxu0
    %v172 = vadd.f32 0.0, %v171
    %v173 = vpop.f32.mrf.mxu0
    %174 = vdwg.mxu0
    %v175 = vmax.f32 %v137, 0.0
    %v176 = vmax.f32 %v142, 0.0
    %v177 = vmax.f32 %v147, 0.0
    %v178 = vmax.f32 %v152, 0.0
    %v179 = vmax.f32 %v157, 0.0
    %v180 = vmax.f32 %v162, 0.0
    %v181 = vmax.f32 %v167, 0.0
    %v182 = vmax.f32 %v172, 0.0
    %v183 = vld [vmem:[%s2] sm:$0xff]
    %v184 = vld [vmem:[%s2 + $0x8] sm:$0xff]
    %v185 = vld [vmem:[%s2 + $0x10] sm:$0xff]
    %v186 = vld [vmem:[%s2 + $0x18] sm:$0xff]
    %vm187 = vcmask 130048
    %v189 = vsel %vm187, %v175, 0
    %v192 = vsel %vm187, %v176, 0
    %v195 = vsel %vm187, %v177, 0
    %v198 = vsel %vm187, %v178, 0
    %v201 = vsel %vm187, %v179, 0
    %v204 = vsel %vm187, %v180, 0
    %v207 = vsel %vm187, %v181, 0
    %v210 = vsel %vm187, %v182, 0
    %v213 = vsel %vm187, %v183, 0
    %v216 = vsel %vm187, %v184, 0
    %v219 = vsel %vm187, %v185, 0
    %v222 = vsel %vm187, %v186, 0
    %224 = vmatprep.subr.mxu0 0.0
    %225 = vmatpush1.xpose.msra.mxu0 0.0
    %226 = vmatprep.subr.mxu0 0.0
    %227 = vmatpush1.xpose.msra.mxu0 0.0
    %228 = vmatprep.subr.mxu0 0.0
    %229 = vmatpush1.xpose.msra.mxu0 0.0
    %230 = vmatprep.subr.mxu0 0.0
    %231 = vmatpush1.xpose.msra.mxu0 0.0
    %232 = vmatprep.subr.mxu0 0.0
    %233 = vmatpush1.xpose.msra.mxu0 0.0
    %234 = vmatprep.subr.mxu0 0.0
    %235 = vmatpush1.xpose.msra.mxu0 0.0
    %236 = vmatprep.subr.mxu0 0.0
    %237 = vmatpush1.xpose.msra.mxu0 0.0
    %238 = vmatprep.subr.mxu0 0.0
    %239 = vmatpush1.xpose.msra.mxu0 0.0
    %240 = vmatprep.subr.mxu0 0.0
    %241 = vmatpush1.xpose.msra.mxu0 0.0
    %242 = vmatprep.subr.mxu0 0.0
    %243 = vmatpush1.xpose.msra.mxu0 0.0
    %244 = vmatprep.subr.mxu0 0.0
    %245 = vmatpush1.xpose.msra.mxu0 0.0
    %246 = vmatprep.subr.mxu0 0.0
    %247 = vmatpush1.xpose.msra.mxu0 0.0
    %248 = vmatprep.subr.mxu0 0.0
    %249 = vmatpush1.xpose.msra.mxu0 %v222
    %250 = vmatprep.subr.mxu0 0.0
    %251 = vmatpush1.xpose.msra.mxu0 %v219
    %252 = vmatprep.subr.mxu0 0.0
    %253 = vmatpush1.xpose.msra.mxu0 %v216
    %254 = vmatprep.subr.mxu0 0.0
    %255 = vmatpush1.xpose.msra.mxu0 %v213
    %256 = vmatprep.subr.mxu0 0.0
    %257 = vmatpush2.xpose.msra.mxu0 0.0
    %258 = vmatprep.subr.mxu0 0.0
    %259 = vmatpush2.xpose.msra.mxu0 0.0
    %260 = vmatprep.subr.mxu0 0.0
    %261 = vmatpush2.xpose.msra.mxu0 0.0
    %262 = vmatprep.subr.mxu0 0.0
    %263 = vmatpush2.xpose.msra.mxu0 0.0
    %264 = vmatprep.subr.mxu0 0.0
    %265 = vmatpush2.xpose.msra.mxu0 0.0
    %266 = vmatprep.subr.mxu0 0.0
    %267 = vmatpush2.xpose.msra.mxu0 0.0
    %268 = vmatprep.subr.mxu0 0.0
    %269 = vmatpush2.xpose.msra.mxu0 0.0
    %270 = vmatprep.subr.mxu0 0.0
    %271 = vmatpush2.xpose.msra.mxu0 0.0
    %272 = vmatprep.subr.mxu0 0.0
    %273 = vmatpush2.xpose.msra.mxu0 0.0
    %274 = vmatprep.subr.mxu0 0.0
    %275 = vmatpush2.xpose.msra.mxu0 0.0
    %276 = vmatprep.subr.mxu0 0.0
    %277 = vmatpush2.xpose.msra.mxu0 0.0
    %278 = vmatprep.subr.mxu0 0.0
    %279 = vmatpush2.xpose.msra.mxu0 0.0
    %280 = vmatprep.subr.mxu0 0.0
    %281 = vmatpush2.xpose.msra.mxu0 0.0
    %282 = vmatprep.subr.mxu0 0.0
    %283 = vmatpush2.xpose.msra.mxu0 0.0
    %284 = vmatprep.subr.mxu0 0.0
    %285 = vmatpush2.xpose.msra.mxu0 0.0
    %286 = vmatprep.subr.mxu0 0.0
    %287 = vmatpush2.xpose.msra.mxu0 0.0
    %288 = vmatprep.mubr.f32.mxu0 0.0
    %289 = vmatmul.mubr.f32.gmra.mxu0 %v189
    %v290 = vpop.f32.mrf.mxu0
    %v291 = vadd.f32 0.0, %v290
    %v292 = vpop.f32.mrf.mxu0
    %293 = vmatprep.mubr.f32.mxu0 0.0
    %294 = vmatmul.mubr.f32.gmra.mxu0 %v192
    %v295 = vpop.f32.mrf.mxu0
    %v296 = vadd.f32 0.0, %v295
    %v297 = vpop.f32.mrf.mxu0
    %298 = vmatprep.mubr.f32.mxu0 0.0
    %299 = vmatmul.mubr.f32.gmra.mxu0 %v195
    %v300 = vpop.f32.mrf.mxu0
    %v301 = vadd.f32 0.0, %v300
    %v302 = vpop.f32.mrf.mxu0
    %303 = vmatprep.mubr.f32.mxu0 0.0
    %304 = vmatmul.mubr.f32.gmra.mxu0 %v198
    %v305 = vpop.f32.mrf.mxu0
    %v306 = vadd.f32 0.0, %v305
    %v307 = vpop.f32.mrf.mxu0
    %308 = vmatprep.mubr.f32.mxu0 0.0
    %309 = vmatmul.mubr.f32.gmra.mxu0 %v201
    %v310 = vpop.f32.mrf.mxu0
    %v311 = vadd.f32 0.0, %v310
    %v312 = vpop.f32.mrf.mxu0
    %313 = vmatprep.mubr.f32.mxu0 0.0
    %314 = vmatmul.mubr.f32.gmra.mxu0 %v204
    %v315 = vpop.f32.mrf.mxu0
    %v316 = vadd.f32 0.0, %v315
    %v317 = vpop.f32.mrf.mxu0
    %318 = vmatprep.mubr.f32.mxu0 0.0
    %319 = vmatmul.mubr.f32.gmra.mxu0 %v207
    %v320 = vpop.f32.mrf.mxu0
    %v321 = vadd.f32 0.0, %v320
    %v322 = vpop.f32.mrf.mxu0
    %323 = vmatprep.mubr.f32.mxu0 0.0
    %324 = vmatmul.mubr.f32.gmra.mxu0 %v210
    %v325 = vpop.f32.mrf.mxu0
    %v326 = vadd.f32 0.0, %v325
    %v327 = vpop.f32.mrf.mxu0
    %328 = vdwg.mxu0
    %v329 = vxor.u32 %v291, 2147483648
    %v330 = vxor.u32 %v296, 2147483648
    %v331 = vxor.u32 %v301, 2147483648
    %v332 = vxor.u32 %v306, 2147483648
    %v333 = vxor.u32 %v311, 2147483648
    %v334 = vxor.u32 %v316, 2147483648
    %v335 = vxor.u32 %v321, 2147483648
    %v336 = vxor.u32 %v326, 2147483648
    %v337 = vmul.f32 %v329, 1.442695
    %v338 = vpow.pop %v337
    %v339 = vmul.f32 %v330, 1.442695
    %v340 = vpow.pop %v339
    %v341 = vmul.f32 %v331, 1.442695
    %v342 = vpow.pop %v341
    %v343 = vmul.f32 %v332, 1.442695
    %v344 = vpow.pop %v343
    %v345 = vmul.f32 %v333, 1.442695
    %v346 = vpow.pop %v345
    %v347 = vmul.f32 %v334, 1.442695
    %v348 = vpow.pop %v347
    %v349 = vmul.f32 %v335, 1.442695
    %v350 = vpow.pop %v349
    %v351 = vmul.f32 %v336, 1.442695
    %v352 = vpow.pop %v351
    %v353 = vadd.f32 %v338, 1.0
    %v354 = vadd.f32 %v340, 1.0
    %v355 = vadd.f32 %v342, 1.0
    %v356 = vadd.f32 %v344, 1.0
    %v357 = vadd.f32 %v346, 1.0
    %v358 = vadd.f32 %v348, 1.0
    %v359 = vadd.f32 %v350, 1.0
    %v360 = vadd.f32 %v352, 1.0
    %v361 = vrcp.pop %v353
    %v362 = vmul.f32 1.0, %v361
    %v363 = vrcp.pop %v354
    %v364 = vmul.f32 1.0, %v363
    %v365 = vrcp.pop %v355
    %v366 = vmul.f32 1.0, %v365
    %v367 = vrcp.pop %v356
    %v368 = vmul.f32 1.0, %v367
    %v369 = vrcp.pop %v357
    %v370 = vmul.f32 1.0, %v369
    %v371 = vrcp.pop %v358
    %v372 = vmul.f32 1.0, %v371
    %v373 = vrcp.pop %v359
    %v374 = vmul.f32 1.0, %v373
    %v375 = vrcp.pop %v360
    %v376 = vmul.f32 1.0, %v375
    %377 = vst.msk [vmem:[#allocation5] sm:$0xff] %vm39, %v362
    %378 = vst.msk [vmem:[#allocation5 + $0x8] sm:$0xff] %vm39, %v364
    %379 = vst.msk [vmem:[#allocation5 + $0x10] sm:$0xff] %vm39, %v366
    %380 = vst.msk [vmem:[#allocation5 + $0x18] sm:$0xff] %vm39, %v368
    %381 = vst.msk [vmem:[#allocation5 + $0x20] sm:$0xff] %vm39, %v370
    %382 = vst.msk [vmem:[#allocation5 + $0x28] sm:$0xff] %vm39, %v372
    %383 = vst.msk [vmem:[#allocation5 + $0x30] sm:$0xff] %vm39, %v374
    %384 = vst.msk [vmem:[#allocation5 + $0x38] sm:$0xff] %vm39, %v376
    // Predicated region
    $region18: #{channel_gate_forward.1} parent=1 // pred_check
      _
    $region19: #{channel_gate_forward.1} parent=1 // pred_check_branch
      %386 = sbr.rel (0) target = $region21
    $region20: #{channel_gate_forward.1} parent=1 // pred_region
      %s388 = ssub.s32 1024, 1024
      %389 = vsyncadd [#allocation4], %s388
      %s390 = sshll.u32 [#allocation5], 4
      %s391 = int_to_ptr.vmem [resolvable:$true] %s390
      %396 = dma.vmem_to_hbm [thread:$0]  %s391, 1024, %s3, [#allocation4], 128, 128, 8
    $region21: #{channel_gate_forward.1} parent=1 // pred_fallthru
      _
    // Predicated region
    $region22: #{channel_gate_forward.1} parent=1 // pred_check
      _
    $region23: #{channel_gate_forward.1} parent=1 // pred_check_branch
      %398 = sbr.rel (0) target = $region25
    $region24: #{channel_gate_forward.1} parent=1 // pred_region
      %399 = dma.done [#allocation4], 1024
    $region25: #{channel_gate_forward.1} parent=1 // pred_fallthru
      _
    %400 = vsyncpa [#allocation3], 1
    %401 = vsyncpa [#allocation4], 1

</llo_original>
